<compile_context>
chip_gen: v6e
topology: v6e:2x2x1
jax: 0.10.0
libtpu: 0.0.40
codegen_flags: <defaults>
</compile_context>

<pallas_src>
import jax
import jax.numpy as jnp
from jax.experimental import pallas as pl
from jax.experimental.pallas import tpu as pltpu

IN_FEATURES = 100
NB_LABELS = 34
TB_MAX = 4096       # batch rows per grid step; safe on v5e / v6e / v7x


def _ffnet_kernel(x_ref, w_ref, b_ref, o_ref):
    # (tb, 100) @ (100, 34) on the MXU with f32 accumulation, then + bias.
    acc = jnp.dot(x_ref[...], w_ref[...], preferred_element_type=jnp.float32)
    o_ref[...] = (acc + b_ref[...]).astype(o_ref.dtype)


def _round_up(v, m):
    return ((v + m - 1) // m) * m


def _choose_tile(batch, tb_max=TB_MAX):
    # Multiple of 8 sublanes, capped at tb_max, aiming for >= 4 grid steps
    # so double-buffering overlaps and v7x can shard steps across its 2 TCs.
    return max(8, min(tb_max, _round_up(pl.cdiv(batch, 4), 8)))


def ffnet_forward(x, w_t, b, *, tb_max=TB_MAX):
    """x: (B, 100) f32, w_t: (100, 34) = W.T, b: (34,).  Returns (B, 34)."""
    B = x.shape[0]
    x = x.astype(jnp.float32)
    w_t = w_t.astype(jnp.float32)
    b2 = b.astype(jnp.float32).reshape(1, NB_LABELS)

    tb = _choose_tile(B, tb_max)
    grid = (pl.cdiv(B, tb),)

    return pl.pallas_call(
        _ffnet_kernel,
        out_shape=jax.ShapeDtypeStruct((B, NB_LABELS), jnp.float32),
        grid=grid,
        in_specs=[
            # x: streamed per batch tile (double-buffered by the pipeline).
            pl.BlockSpec((tb, IN_FEATURES), lambda i: (i, 0)),
            # weight & bias: same block every step -> stay VMEM-resident.
            pl.BlockSpec((IN_FEATURES, NB_LABELS), lambda i: (0, 0)),
            pl.BlockSpec((1, NB_LABELS), lambda i: (0, 0)),
        ],
        out_specs=pl.BlockSpec((tb, NB_LABELS), lambda i: (i, 0)),
        compiler_params=pltpu.CompilerParams(
            # Independent batch tiles -> shard grid steps across TCs on v7x.
            dimension_semantics=("parallel",),
        ),
        cost_estimate=pl.CostEstimate(
            flops=2 * B * IN_FEATURES * NB_LABELS,
            transcendentals=0,
            # Matches what the kernel actually DMAs (no padded slabs).
            bytes_accessed=4 * (B * IN_FEATURES
                                + IN_FEATURES * NB_LABELS
                                + NB_LABELS
                                + B * NB_LABELS),
        ),
    )(x, w_t, b2)


def init_params(key):
    # Deterministic init mimicking nn.Linear's uniform(-1/sqrt(fan_in), ...).
    kw, kb = jax.random.split(key)
    bound = 1.0 / jnp.sqrt(jnp.float32(IN_FEATURES))
    # Stored already transposed: (in_features, out_features)
    w_t = jax.random.uniform(kw, (IN_FEATURES, NB_LABELS), jnp.float32,
                             minval=-bound, maxval=bound)
    b = jax.random.uniform(kb, (NB_LABELS,), jnp.float32,
                           minval=-bound, maxval=bound)
    return w_t, b


if __name__ == "__main__":
    key = jax.random.PRNGKey(0)
    k_x, k_x2, k_p = jax.random.split(key, 3)
    w_t, b = init_params(k_p)

    # Case 1: small batch, single grid step.
    x = jax.random.normal(k_x, (8, IN_FEATURES), jnp.float32)
    y = ffnet_forward(x, w_t, b)
    jax.block_until_ready(y)
    y_ref = x @ w_t + b[None, :]
    assert y.shape == (8, NB_LABELS)
    assert jnp.allclose(y, y_ref, atol=1e-5, rtol=1e-5)

    # Case 2: ragged batch (grid does not divide B -> OOB output writes masked).
    x2 = jax.random.normal(k_x2, (37, IN_FEATURES), jnp.float32)
    y2 = ffnet_forward(x2, w_t, b)
    jax.block_until_ready(y2)
    y2_ref = x2 @ w_t + b[None, :]
    assert y2.shape == (37, NB_LABELS)
    assert jnp.allclose(y2, y2_ref, atol=1e-5, rtol=1e-5)

    print("KERNEL_OK")
</pallas_src>

<mosaic_0001>
module attributes {stable_mosaic.version = 11 : i64} {
  func.func @_ffnet_kernel(%arg0: i32, %arg1: memref<8x100xf32, #tpu.memory_space<vmem>>, %arg2: memref<100x34xf32, #tpu.memory_space<vmem>>, %arg3: memref<1x34xf32, #tpu.memory_space<vmem>>, %arg4: memref<8x34xf32, #tpu.memory_space<vmem>>) attributes {dimension_semantics = [#tpu.dimension_semantics<parallel>], iteration_bounds = array<i64: 1>, scalar_prefetch = 0 : i64, scratch_operands = 0 : i64, tpu.core_type = #tpu.core_type<tc>, window_params = [{transform_indices = @transform_0, window_bounds = array<i64: 8, 100>}, {pipeline_mode = #tpu.pipeline_mode<synchronous>, transform_indices = @transform_1, window_bounds = array<i64: 100, 34>}, {pipeline_mode = #tpu.pipeline_mode<synchronous>, transform_indices = @transform_2, window_bounds = array<i64: 1, 34>}, {transform_indices = @transform_3, window_bounds = array<i64: 8, 34>}]} {
    %c0 = arith.constant 0 : index
    %c0_0 = arith.constant 0 : index
    %0 = vector.load %arg1[%c0, %c0_0] : memref<8x100xf32, #tpu.memory_space<vmem>>, vector<8x100xf32>
    %c0_1 = arith.constant 0 : index
    %c0_2 = arith.constant 0 : index
    %1 = vector.load %arg2[%c0_1, %c0_2] : memref<100x34xf32, #tpu.memory_space<vmem>>, vector<100x34xf32>
    %cst = arith.constant dense<0.000000e+00> : vector<8x34xf32>
    %2 = tpu.matmul %0, %1, %cst {dimension_numbers = #tpu.dot_dimension_numbers<[1], [0], [0], [1], [0, 0, 1, 1], [], []>} : vector<8x100xf32>, vector<100x34xf32>, vector<8x34xf32> -> vector<8x34xf32>
    %c0_3 = arith.constant 0 : index
    %c0_4 = arith.constant 0 : index
    %3 = vector.load %arg3[%c0_3, %c0_4] : memref<1x34xf32, #tpu.memory_space<vmem>>, vector<1x34xf32>
    %4 = vector.broadcast %3 : vector<1x34xf32> to vector<8x34xf32>
    %5 = arith.addf %2, %4 : vector<8x34xf32>
    %c0_5 = arith.constant 0 : index
    %c0_6 = arith.constant 0 : index
    %6 = vector.load %arg4[%c0_5, %c0_6] : memref<8x34xf32, #tpu.memory_space<vmem>>, vector<8x34xf32>
    tpu.vector_store %arg4[%c0_5, %c0_6], %5 {strides = array<i32>} : memref<8x34xf32, #tpu.memory_space<vmem>>, vector<8x34xf32>,
    return
  }
  func.func @transform_0(%arg0: i32) -> (i32, i32) {
    %c0_i32 = arith.constant 0 : i32
    %c0_i32_0 = arith.constant 0 : i32
    return %arg0, %c0_i32 : i32, i32
  }
  func.func @transform_1(%arg0: i32) -> (i32, i32) {
    %c0_i32 = arith.constant 0 : i32
    %c0_i32_0 = arith.constant 0 : i32
    %c0_i32_1 = arith.constant 0 : i32
    return %c0_i32, %c0_i32_0 : i32, i32
  }
  func.func @transform_2(%arg0: i32) -> (i32, i32) {
    %c0_i32 = arith.constant 0 : i32
    %c0_i32_0 = arith.constant 0 : i32
    %c0_i32_1 = arith.constant 0 : i32
    return %c0_i32, %c0_i32_0 : i32, i32
  }
  func.func @transform_3(%arg0: i32) -> (i32, i32) {
    %c0_i32 = arith.constant 0 : i32
    %c0_i32_0 = arith.constant 0 : i32
    return %arg0, %c0_i32 : i32, i32
  }
}

</mosaic_0001>

<llo_original>
// kernel: tpu_custom_call.1
$region0: #{tpu_custom_call.1}
  #allocation0 [shape = 'u32[]', space=smem, size = 0x4, offset = 0x4, fixed_abs, tag = 'smem constant byte address 0x4 - core index']
  #allocation1 [shape = 'u32[144,128]{1,0:T(1,128)}', space=vmem, size = 0x12000, scoped, tag = 'internal scratch']
  %s0 = inlined_call_operand.vmem [shape: f32[8,100], index: 0, kind: input, shape index: {}]
  %s1 = inlined_call_operand.vmem [shape: f32[100,34], index: 1, kind: input, shape index: {}]
  %s2 = inlined_call_operand.vmem [shape: f32[1,34], index: 2, kind: input, shape index: {}]
  %s3 = inlined_call_operand.hbm [shape: f32[8,34], index: 3, kind: output, shape index: {}]
  %s4 = sld [smem:[#allocation0]]
  $region22: #{tpu_custom_call.1} parent=0
    _
  %s6 = ssub.s32 1, %s4
  %s7 = scalar_select 0, %s6, %s4
  $region1: #{tpu_custom_call.1} parent=0
    #allocation2 [shape = 'u8[4096]{0}', space=vmem, size = 0x1000, scoped, tag = 'output window, operand 0, single buffered']
    #allocation3 [shape = 's32[1]{0}', space=sflag, size = 0x4, scoped, tag = 'scoped memory for tpu_custom_call.1']
    %8 = vsyncpa [#allocation3], 0
    // Predicated region
    $region2: #{tpu_custom_call.1} parent=1 // pred_check
      _
    $region3: #{tpu_custom_call.1} parent=1 // pred_check_branch
      %10 = sbr.rel (0) target = $region5
    $region4: #{tpu_custom_call.1} parent=1 // pred_region
      _
    $region5: #{tpu_custom_call.1} parent=1 // pred_fallthru
      _
    // Predicated region
    $region6: #{tpu_custom_call.1} parent=1 // pred_check
      _
    $region7: #{tpu_custom_call.1} parent=1 // pred_check_branch
      %12 = sbr.rel (0) target = $region9
    $region8: #{tpu_custom_call.1} parent=1 // pred_region
      _
    $region9: #{tpu_custom_call.1} parent=1 // pred_fallthru
      _
    // Predicated region
    $region10: #{tpu_custom_call.1} parent=1 // pred_check
      _
    $region11: #{tpu_custom_call.1} parent=1 // pred_check_branch
      %14 = sbr.rel (0) target = $region13
    $region12: #{tpu_custom_call.1} parent=1 // pred_region
      _
    $region13: #{tpu_custom_call.1} parent=1 // pred_fallthru
      _
    %v15 = vld [vmem:[%s0] sm:$0xff]
    %v16 = vld [vmem:[%s1] sm:$0xff]
    %v17 = vld [vmem:[%s1 + $0x8] sm:$0xff]
    %v18 = vld [vmem:[%s1 + $0x10] sm:$0xff]
    %v19 = vld [vmem:[%s1 + $0x18] sm:$0xff]
    %v20 = vld [vmem:[%s1 + $0x20] sm:$0xff]
    %v21 = vld [vmem:[%s1 + $0x28] sm:$0xff]
    %v22 = vld [vmem:[%s1 + $0x30] sm:$0xff]
    %v23 = vld [vmem:[%s1 + $0x38] sm:$0xff]
    %v24 = vld [vmem:[%s1 + $0x40] sm:$0xff]
    %v25 = vld [vmem:[%s1 + $0x48] sm:$0xff]
    %v26 = vld [vmem:[%s1 + $0x50] sm:$0xff]
    %v27 = vld [vmem:[%s1 + $0x58] sm:$0xff]
    %v28 = vld [vmem:[%s1 + $0x60] sm:$0xf]
    %v29 = vld [vmem:[%s2] sm:$0x1]
    %v31 = vlaneseq
    %v32 = vshrl.u32 %v31, 7
    %v33 = vsub.s32 0, %v32
    %v34 = vrot.slane %v29, %v33
    %vm36 = vcmask 818176
    %v38 = vsel %vm36, %v15, 0
    %vm40 = vcmask 1043456
    %v42 = vsel %vm40, %v28, 0
    %44 = vmatprep.subr.mxu0 0.0
    %45 = vmatpush1.msra.mxu0 0.0
    %46 = vmatprep.subr.mxu0 0.0
    %47 = vmatpush1.msra.mxu0 0.0
    %48 = vmatprep.subr.mxu0 0.0
    %49 = vmatpush1.msra.mxu0 0.0
    %50 = vmatprep.subr.mxu0 0.0
    %51 = vmatpush1.msra.mxu0 %v42
    %52 = vmatprep.subr.mxu0 0.0
    %53 = vmatpush1.msra.mxu0 %v27
    %54 = vmatprep.subr.mxu0 0.0
    %55 = vmatpush1.msra.mxu0 %v26
    %56 = vmatprep.subr.mxu0 0.0
    %57 = vmatpush1.msra.mxu0 %v25
    %58 = vmatprep.subr.mxu0 0.0
    %59 = vmatpush1.msra.mxu0 %v24
    %60 = vmatprep.subr.mxu0 0.0
    %61 = vmatpush1.msra.mxu0 %v23
    %62 = vmatprep.subr.mxu0 0.0
    %63 = vmatpush1.msra.mxu0 %v22
    %64 = vmatprep.subr.mxu0 0.0
    %65 = vmatpush1.msra.mxu0 %v21
    %66 = vmatprep.subr.mxu0 0.0
    %67 = vmatpush1.msra.mxu0 %v20
    %68 = vmatprep.subr.mxu0 0.0
    %69 = vmatpush1.msra.mxu0 %v19
    %70 = vmatprep.subr.mxu0 0.0
    %71 = vmatpush1.msra.mxu0 %v18
    %72 = vmatprep.subr.mxu0 0.0
    %73 = vmatpush1.msra.mxu0 %v17
    %74 = vmatprep.subr.mxu0 0.0
    %75 = vmatpush1.msra.mxu0 %v16
    %76 = vmatprep.subr.mxu0 0.0
    %77 = vmatpush2.msra.mxu0 0.0
    %78 = vmatprep.subr.mxu0 0.0
    %79 = vmatpush2.msra.mxu0 0.0
    %80 = vmatprep.subr.mxu0 0.0
    %81 = vmatpush2.msra.mxu0 0.0
    %82 = vmatprep.subr.mxu0 0.0
    %83 = vmatpush2.msra.mxu0 0.0
    %84 = vmatprep.subr.mxu0 0.0
    %85 = vmatpush2.msra.mxu0 0.0
    %86 = vmatprep.subr.mxu0 0.0
    %87 = vmatpush2.msra.mxu0 0.0
    %88 = vmatprep.subr.mxu0 0.0
    %89 = vmatpush2.msra.mxu0 0.0
    %90 = vmatprep.subr.mxu0 0.0
    %91 = vmatpush2.msra.mxu0 0.0
    %92 = vmatprep.subr.mxu0 0.0
    %93 = vmatpush2.msra.mxu0 0.0
    %94 = vmatprep.subr.mxu0 0.0
    %95 = vmatpush2.msra.mxu0 0.0
    %96 = vmatprep.subr.mxu0 0.0
    %97 = vmatpush2.msra.mxu0 0.0
    %98 = vmatprep.subr.mxu0 0.0
    %99 = vmatpush2.msra.mxu0 0.0
    %100 = vmatprep.subr.mxu0 0.0
    %101 = vmatpush2.msra.mxu0 0.0
    %102 = vmatprep.subr.mxu0 0.0
    %103 = vmatpush2.msra.mxu0 0.0
    %104 = vmatprep.subr.mxu0 0.0
    %105 = vmatpush2.msra.mxu0 0.0
    %106 = vmatprep.subr.mxu0 0.0
    %107 = vmatpush2.msra.mxu0 0.0
    %108 = vmatprep.mubr.f32.mxu0 0.0
    %109 = vmatmul.mubr.f32.gmra.mxu0 %v38
    %v110 = vpop.f32.mrf.mxu0
    %v111 = vadd.f32 %v34, %v110
    %v112 = vpop.f32.mrf.mxu0
    %113 = vdwg.mxu0
    %vm114 = vcmask 277504
    %115 = vst.msk [vmem:[#allocation2] sm:$0xff] %vm114, %v111
    // Predicated region
    $region14: #{tpu_custom_call.1} parent=1 // pred_check
      _
    $region15: #{tpu_custom_call.1} parent=1 // pred_check_branch
      %117 = sbr.rel (0) target = $region17
    $region16: #{tpu_custom_call.1} parent=1 // pred_region
      %s119 = ssub.s32 128, 128
      %120 = vsyncadd [#allocation3], %s119
      %s122 = sshll.u32 [#allocation2], 4
      %s123 = int_to_ptr.vmem [resolvable:$true] %s122
      %125 = dma.vmem_to_hbm [thread:$0]  %s123, 128, %s3, [#allocation3]
    $region17: #{tpu_custom_call.1} parent=1 // pred_fallthru
      _
    // Predicated region
    $region18: #{tpu_custom_call.1} parent=1 // pred_check
      _
    $region19: #{tpu_custom_call.1} parent=1 // pred_check_branch
      %127 = sbr.rel (0) target = $region21
    $region20: #{tpu_custom_call.1} parent=1 // pred_region
      %128 = dma.done [#allocation3], 128
    $region21: #{tpu_custom_call.1} parent=1 // pred_fallthru
      _
    %129 = vsyncpa [#allocation3], 1

</llo_original>
